<compile_context>
chip_gen: v7x
topology: tpu7x:2x2x1
jax: 0.10.0
libtpu: 0.0.40
codegen_flags: <defaults>
</compile_context>

<pallas_src>
import math

import jax
import jax.numpy as jnp
from jax.experimental import pallas as pl
from jax.experimental.pallas import tpu as pltpu


def _normalize_kernel(x_ref, o_ref):
    # (x - 0.5) / 0.5  ==  2*x - 1   (exact for these constants)
    o_ref[...] = x_ref[...] * 2 - 1


# Below this element count the custom-call / grid-setup overhead dwarfs the
# copy; kept below the demo shape (2048 elems) so the Pallas path is exercised.
_MIN_PALLAS_ELEMS = 1024


def _ceil_div(a: int, b: int) -> int:
    return -(-a // b)


def _round_up(a: int, m: int) -> int:
    return _ceil_div(a, m) * m


def _tpu_block_params():
    """Generation-dependent block budget / VMEM limit / TensorCore count.

    All queries are best-effort; fallbacks are safe on every TPU generation.
    """
    vmem_cap = None
    try:
        vmem_cap = int(pltpu.get_tpu_info().vmem_capacity_bytes)
    except Exception:
        vmem_cap = None
    kind = ""
    try:
        kind = jax.devices()[0].device_kind.lower()
    except Exception:
        pass

    # v7x: 2 TensorCores per chip, only 64 MiB VMEM per TC -> smaller blocks,
    # and shard the grid across both cores.
    is_v7 = ("7" in kind) or (vmem_cap is not None and vmem_cap <= 64 * 1024 * 1024)
    if is_v7:
        return dict(block_bytes=6 * 1024 * 1024,
                    vmem_limit=40 * 1024 * 1024,
                    num_tc=2)

    # v5e / v6e: single TC, 128 MiB VMEM -> one big block amortizes the
    # ~0.35 us per-grid-step overhead; the grid is a serial loop anyway.
    if vmem_cap is not None and vmem_cap >= 100 * 1024 * 1024:
        return dict(block_bytes=8 * 1024 * 1024,
                    vmem_limit=64 * 1024 * 1024,
                    num_tc=1)

    # Unknown generation: conservative budget that fits every chip.
    return dict(block_bytes=6 * 1024 * 1024,
                vmem_limit=40 * 1024 * 1024,
                num_tc=1)


def normalize(x: jax.Array) -> jax.Array:
    """Applies (x - 0.5) / 0.5 elementwise, matching the PyTorch module."""
    orig_shape = x.shape
    dtype = x.dtype
    n = math.prod(orig_shape) if orig_shape else 1
    if n == 0:
        return x

    # Integer inputs: keep torch's float promotion semantics; doing 2*x - 1 in
    # integer arithmetic would be wrong (and can overflow int8).
    if not jnp.issubdtype(dtype, jnp.floating):
        return (x - 0.5) / 0.5

    # Widest lane-dense slab width that divides n exactly -> no pad, no slice,
    # every store a full-width (unmasked) vst.
    lanes = 0
    for cand in (512, 256, 128):
        if n % cand == 0:
            lanes = cand
            break

    # Tiny inputs, or ragged sizes where a pad/slice (or tail + concat) would
    # each add a full extra HBM pass: plain fused XLA is already at roofline.
    if lanes == 0 or n < _MIN_PALLAS_ELEMS:
        return (x - 0.5) / 0.5

    itemsize = jnp.dtype(dtype).itemsize
    sublane = max(8, 32 // itemsize)        # 8 (f32), 16 (bf16/f16), 32 (fp8)
    n_rows = n // lanes

    params = _tpu_block_params()
    block_bytes = params["block_bytes"]
    num_tc = params["num_tc"]

    row_budget = max(sublane,
                     (block_bytes // (lanes * itemsize)) // sublane * sublane)

    if n_rows <= row_budget:
        block_rows = n_rows                 # single full-extent block (always legal)
    else:
        block_rows = row_budget             # multiple of `sublane`; ragged last
                                            # block is masked by Pallas.
    num_blocks = _ceil_div(n_rows, block_rows)

    # On 2-TC chips make sure the "parallel" axis has >= 4 evenly sized blocks
    # so both TensorCores stay busy; on 1-TC chips keep the single largest
    # block (the grid is just a serial loop there).
    if num_tc >= 2:
        desired = 2 * num_tc
        if num_blocks < desired and n_rows >= desired * sublane:
            block_rows = _round_up(_ceil_div(n_rows, desired), sublane)
            num_blocks = _ceil_div(n_rows, block_rows)

    x2d = x.reshape(n_rows, lanes)          # lane-dense slab (layout plumbing)

    out2d = pl.pallas_call(
        _normalize_kernel,
        out_shape=jax.ShapeDtypeStruct((n_rows, lanes), dtype),
        grid=(num_blocks,),
        in_specs=[pl.BlockSpec((block_rows, lanes), lambda i: (i, 0))],
        out_specs=pl.BlockSpec((block_rows, lanes), lambda i: (i, 0)),
        compiler_params=pltpu.CompilerParams(
            dimension_semantics=("parallel",),
            vmem_limit_bytes=params["vmem_limit"],
        ),
        cost_estimate=pl.CostEstimate(
            flops=2 * n, transcendentals=0, bytes_accessed=2 * n * itemsize
        ),
    )(x2d)

    return out2d.reshape(orig_shape)


if __name__ == "__main__":
    key = jax.random.PRNGKey(0)
    # NCHW input, small shapes: batch=2, channels=4, H=W=16.
    x = jax.random.uniform(key, (2, 4, 16, 16), dtype=jnp.float32)

    y = normalize(x)
    jax.block_until_ready(y)

    y_ref = (x - 0.5) / 0.5
    assert y.shape == x.shape and y.dtype == x.dtype
    assert jnp.allclose(y, y_ref, atol=1e-6, rtol=1e-6)

    # Larger shape: exercises the multi-block grid (and v7x 2-core split).
    x2 = jax.random.uniform(jax.random.PRNGKey(1), (16, 16, 128, 128),
                            dtype=jnp.float32)
    y2 = normalize(x2)
    jax.block_until_ready(y2)
    assert jnp.allclose(y2, (x2 - 0.5) / 0.5, atol=1e-6, rtol=1e-6)

    print("KERNEL_OK")
</pallas_src>

<mosaic_0001>
module attributes {stable_mosaic.version = 11 : i64} {
  func.func @_normalize_kernel(%arg0: i32, %arg1: memref<4x512xf32, #tpu.memory_space<vmem>>, %arg2: memref<4x512xf32, #tpu.memory_space<vmem>>) attributes {dimension_semantics = [#tpu.dimension_semantics<parallel>], iteration_bounds = array<i64: 1>, scalar_prefetch = 0 : i64, scratch_operands = 0 : i64, tpu.core_type = #tpu.core_type<tc>, window_params = [{transform_indices = @transform_0, window_bounds = array<i64: 4, 512>}, {transform_indices = @transform_1, window_bounds = array<i64: 4, 512>}]} {
    %c0 = arith.constant 0 : index
    %c0_0 = arith.constant 0 : index
    %0 = vector.load %arg1[%c0, %c0_0] : memref<4x512xf32, #tpu.memory_space<vmem>>, vector<4x512xf32>
    %cst = arith.constant 2.000000e+00 : f32
    %1 = vector.broadcast %cst : f32 to vector<4x512xf32>
    %2 = arith.mulf %0, %1 : vector<4x512xf32>
    %cst_1 = arith.constant 1.000000e+00 : f32
    %3 = vector.broadcast %cst_1 : f32 to vector<4x512xf32>
    %4 = arith.subf %2, %3 : vector<4x512xf32>
    %c0_2 = arith.constant 0 : index
    %c0_3 = arith.constant 0 : index
    %5 = vector.load %arg2[%c0_2, %c0_3] : memref<4x512xf32, #tpu.memory_space<vmem>>, vector<4x512xf32>
    tpu.vector_store %arg2[%c0_2, %c0_3], %4 {strides = array<i32>} : memref<4x512xf32, #tpu.memory_space<vmem>>, vector<4x512xf32>,
    return
  }
  func.func @transform_0(%arg0: i32) -> (i32, i32) {
    %c0_i32 = arith.constant 0 : i32
    %c0_i32_0 = arith.constant 0 : i32
    return %arg0, %c0_i32 : i32, i32
  }
  func.func @transform_1(%arg0: i32) -> (i32, i32) {
    %c0_i32 = arith.constant 0 : i32
    %c0_i32_0 = arith.constant 0 : i32
    return %arg0, %c0_i32 : i32, i32
  }
}

</mosaic_0001>

<llo_original>
// kernel: tpu_custom_call.1
$region0: #{tpu_custom_call.1}
  #allocation0 [shape = 'u32[]', space=smem, size = 0x4, offset = 0x4, fixed_abs, tag = 'smem constant byte address 0x4 - core index']
  #allocation1 [shape = 'u32[144,128]{1,0:T(1,128)}', space=vmem, size = 0x12000, scoped, tag = 'internal scratch']
  %s0 = inlined_call_operand.hbm [shape: f32[4,512], index: 0, kind: input, shape index: {}]
  %s1 = inlined_call_operand.hbm [shape: f32[4,512], index: 1, kind: output, shape index: {}]
  %s2 = sld [smem:[#allocation0]]
  $region18: #{tpu_custom_call.1} parent=0
    _
  %s4 = ssub.s32 1, %s2
  %s5 = scalar_select 0, %s4, %s2
  $region1: #{tpu_custom_call.1} parent=0
    #allocation2 [shape = 'u8[8192]{0}', space=vmem, size = 0x2000, scoped, tag = 'input window, operand 0, single buffered']
    #allocation3 [shape = 's32[1]{0}', space=sflag, size = 0x4, scoped, tag = 'scoped memory for tpu_custom_call.1']
    #allocation4 [shape = 's32[1]{0}', space=sflag, size = 0x4, scoped, tag = 'scoped memory for tpu_custom_call.1']
    #allocation5 [shape = 'u8[8192]{0}', space=vmem, size = 0x2000, scoped, tag = 'output window, operand 0, single buffered']
    %6 = vsyncpa [#allocation3], 0
    %7 = vsyncpa [#allocation4], 0
    // Predicated region
    $region2: #{tpu_custom_call.1} parent=1 // pred_check
      _
    $region3: #{tpu_custom_call.1} parent=1 // pred_check_branch
      %9 = sbr.rel (0) target = $region5
    $region4: #{tpu_custom_call.1} parent=1 // pred_region
      %s11 = ssub.s32 256, 256
      %12 = vsyncadd [#allocation3], %s11
      %s14 = sshll.u32 [#allocation2], 4
      %s15 = int_to_ptr.vmem [resolvable:$true] %s14
      %17 = dma.hbm_to_vmem [thread:$0]  %s0, 256, %s15, [#allocation3]
    $region5: #{tpu_custom_call.1} parent=1 // pred_fallthru
      _
    // Predicated region
    $region6: #{tpu_custom_call.1} parent=1 // pred_check
      _
    $region7: #{tpu_custom_call.1} parent=1 // pred_check_branch
      %19 = sbr.rel (0) target = $region9
    $region8: #{tpu_custom_call.1} parent=1 // pred_region
      %20 = dma.done [#allocation3], 256
    $region9: #{tpu_custom_call.1} parent=1 // pred_fallthru
      _
    %v21 = vld [vmem:[#allocation2] sm:$0xff]
    %v22 = vld [vmem:[#allocation2 + $0x8] sm:$0xff]
    %v23 = vmul.f32 %v21, 2.0
    %v24 = vmul.f32 %v22, 2.0
    %v25 = vsub.f32 %v23, 1.0
    %v26 = vsub.f32 %v24, 1.0
    %27 = vst [vmem:[#allocation5] sm:$0xff] %v25
    %28 = vst [vmem:[#allocation5 + $0x8] sm:$0xff] %v26
    // Predicated region
    $region10: #{tpu_custom_call.1} parent=1 // pred_check
      _
    $region11: #{tpu_custom_call.1} parent=1 // pred_check_branch
      %30 = sbr.rel (0) target = $region13
    $region12: #{tpu_custom_call.1} parent=1 // pred_region
      %s32 = ssub.s32 256, 256
      %33 = vsyncadd [#allocation4], %s32
      %s35 = sshll.u32 [#allocation5], 4
      %s36 = int_to_ptr.vmem [resolvable:$true] %s35
      %38 = dma.vmem_to_hbm [thread:$0]  %s36, 256, %s1, [#allocation4]
    $region13: #{tpu_custom_call.1} parent=1 // pred_fallthru
      _
    // Predicated region
    $region14: #{tpu_custom_call.1} parent=1 // pred_check
      _
    $region15: #{tpu_custom_call.1} parent=1 // pred_check_branch
      %40 = sbr.rel (0) target = $region17
    $region16: #{tpu_custom_call.1} parent=1 // pred_region
      %41 = dma.done [#allocation4], 256
    $region17: #{tpu_custom_call.1} parent=1 // pred_fallthru
      _
    %42 = vsyncpa [#allocation3], 1
    %43 = vsyncpa [#allocation4], 1

</llo_original>
